<compile_context>
chip_gen: v5e
topology: v5e:2x2
jax: 0.10.0
libtpu: 0.0.40
codegen_flags: <defaults>
</compile_context>

<pallas_src>
import functools

import jax
import jax.numpy as jnp
from jax.experimental import pallas as pl
from jax.experimental.pallas import tpu as pltpu


def _double_linear_kernel(x_ref, w1t_ref, b1_ref, w2t_ref, b2_ref, out_ref):
    # x_ref:   (TM, Kp)  input rows (possibly bf16)
    # w1t_ref: (Kp, Kp)  pre-transposed linear1 weight (W1^T), VMEM-resident
    # b1_ref:  (1,  Kp)  linear1 bias (f32)
    # w2t_ref: (Kp, Kp)  pre-transposed linear2 weight (W2^T), VMEM-resident
    # b2_ref:  (1,  Kp)  linear2 bias (f32)
    x = x_ref[...]
    h = jnp.dot(x, w1t_ref[...], preferred_element_type=jnp.float32) + b1_ref[...]
    y = jnp.dot(h.astype(w2t_ref.dtype), w2t_ref[...],
                preferred_element_type=jnp.float32) + b2_ref[...]
    out_ref[...] = y.astype(out_ref.dtype)


def _round_up(x, m):
    return pl.cdiv(x, m) * m


def _vmem_cap_bytes():
    # Generation-aware cap with ~25% headroom for compiler scratch.
    try:
        phys = pltpu.get_tpu_info().vmem_capacity_bytes
    except Exception:
        phys = 64 << 20  # conservative: v7x per-TC VMEM
    return int(phys * 3 // 4)


def double_linear(x2d, w1, b1, w2, b2, *, tm_max=512, use_bf16=False):
    """x2d: (M, K). Returns (M, K) = linear2(linear1(x2d)).

    w1, w2 are PyTorch-layout (out_features, in_features) weights.
    """
    M, K = x2d.shape
    out_dtype = x2d.dtype
    comp_dtype = jnp.bfloat16 if use_bf16 else x2d.dtype

    # Lane-dense feature dim (multiple of 128).
    Kp = _round_up(max(K, 128), 128)

    # Row tile: even split across grid steps to minimize last-tile padding.
    tm_max = max(8, _round_up(int(tm_max), 8))
    n_tiles = pl.cdiv(M, tm_max)
    TM = _round_up(pl.cdiv(M, n_tiles), 8)

    # --- VMEM accounting (single-buffered weights, double-buffered x/out,
    #     plus the f32 h / pre-cast y temporaries the compiler materializes).
    cap = _vmem_cap_bytes()
    itx = jnp.dtype(comp_dtype).itemsize
    ito = jnp.dtype(out_dtype).itemsize
    wt_bytes = 2 * Kp * Kp * itx + 2 * Kp * 4  # W1^T + W2^T (Buffered(1)) + biases
    assert wt_bytes < cap, (
        "Resident Kp x Kp weights do not fit VMEM; a K/N-tiled path is required.")

    def step_bytes(tm):
        return (wt_bytes
                + 2 * tm * Kp * itx    # double-buffered x tiles
                + 2 * tm * Kp * ito    # double-buffered out tiles
                + 2 * tm * Kp * 4)     # f32 h + pre-cast y temporaries

    while TM > 8 and step_bytes(TM) + (2 << 20) > cap:
        TM = max(8, _round_up(TM // 2, 8))

    Mp = _round_up(M, TM)
    grid_m = Mp // TM
    vmem_limit = int(max(16 << 20, min(step_bytes(TM) + (4 << 20), cap)))

    # --- Pad only when necessary (zero padding is exact: padded feature
    #     columns of x contract against zero rows of W^T and a zero bias, so
    #     they stay zero through both linears; padded rows are sliced off).
    need_col_pad = (Kp != K)
    need_row_pad = (Mp != M)

    x2d_c = x2d.astype(comp_dtype) if use_bf16 else x2d
    if need_col_pad or need_row_pad:
        xp = jnp.zeros((Mp, Kp), comp_dtype).at[:M, :K].set(x2d_c)
    else:
        xp = x2d_c

    w1t_full = w1.T.astype(comp_dtype)   # pre-transpose ONCE in the wrapper
    w2t_full = w2.T.astype(comp_dtype)
    if need_col_pad:
        w1t = jnp.zeros((Kp, Kp), comp_dtype).at[:K, :K].set(w1t_full)
        w2t = jnp.zeros((Kp, Kp), comp_dtype).at[:K, :K].set(w2t_full)
        b1p = jnp.zeros((1, Kp), jnp.float32).at[0, :K].set(b1.astype(jnp.float32))
        b2p = jnp.zeros((1, Kp), jnp.float32).at[0, :K].set(b2.astype(jnp.float32))
    else:
        w1t, w2t = w1t_full, w2t_full
        b1p = b1.astype(jnp.float32).reshape(1, Kp)
        b2p = b2.astype(jnp.float32).reshape(1, Kp)

    cost = pl.CostEstimate(
        flops=2 * 2 * Mp * Kp * Kp,
        transcendentals=0,
        bytes_accessed=itx * (Mp * Kp + 2 * Kp * Kp) + ito * Mp * Kp + 2 * Kp * 4,
    )

    out = pl.pallas_call(
        _double_linear_kernel,
        out_shape=jax.ShapeDtypeStruct((Mp, Kp), out_dtype),
        grid_spec=pltpu.PrefetchScalarGridSpec(
            num_scalar_prefetch=0,
            grid=(grid_m,),
            in_specs=[
                # x rows: tiled over M, default double-buffered pipeline.
                pl.BlockSpec((TM, Kp), lambda i: (i, 0)),
                # Resident operands: constant index_map -> single buffer.
                pl.BlockSpec((Kp, Kp), lambda i: (0, 0),
                             pipeline_mode=pl.Buffered(1)),
                pl.BlockSpec((1, Kp), lambda i: (0, 0),
                             pipeline_mode=pl.Buffered(1)),
                pl.BlockSpec((Kp, Kp), lambda i: (0, 0),
                             pipeline_mode=pl.Buffered(1)),
                pl.BlockSpec((1, Kp), lambda i: (0, 0),
                             pipeline_mode=pl.Buffered(1)),
            ],
            out_specs=pl.BlockSpec((TM, Kp), lambda i: (i, 0)),
        ),
        compiler_params=pltpu.CompilerParams(
            dimension_semantics=("parallel",),
            vmem_limit_bytes=vmem_limit,
        ),
        cost_estimate=cost,
    )(xp, w1t, b1p, w2t, b2p)

    if need_col_pad or need_row_pad:
        out = out[:M, :K]
    return out


@functools.partial(jax.jit, static_argnames=("tm_max", "use_bf16"))
def model_forward(x1, w1, b1, w2, b2, *, tm_max=512, use_bf16=False):
    """Mirrors Model.forward. x1: (B, C, S). Returns (v1, v22)."""
    # v1 = x1.permute(0, 2, 1)  -- layout-only glue, fused under jit.
    v1 = jnp.transpose(x1, (0, 2, 1))
    B, S, K = v1.shape
    v1_flat = v1.reshape(B * S, K)
    v22_flat = double_linear(v1_flat, w1, b1, w2, b2,
                             tm_max=tm_max, use_bf16=use_bf16)
    v22 = v22_flat.reshape(B, S, K)
    return v1, v22


if __name__ == "__main__":
    key = jax.random.PRNGKey(0)
    k_x, k_w1, k_b1, k_w2, k_b2 = jax.random.split(key, 5)

    # Shapes implied by the module: x1 (1, 2, 2), Linear(2, 2) weights/biases.
    B, C, S = 1, 2, 2
    x1 = jax.random.normal(k_x, (B, C, S), dtype=jnp.float32)

    # PyTorch Linear layout: weight (out, in), bias (out,)
    w1 = jax.random.normal(k_w1, (2, 2), dtype=jnp.float32) * 0.5
    b1 = jax.random.normal(k_b1, (2,), dtype=jnp.float32) * 0.1
    w2 = jax.random.normal(k_w2, (2, 2), dtype=jnp.float32) * 0.5
    b2 = jax.random.normal(k_b2, (2,), dtype=jnp.float32) * 0.1

    v1, v22 = model_forward(x1, w1, b1, w2, b2)
    jax.block_until_ready((v1, v22))

    # Reference check in plain JAX (same semantics as F.linear).
    v1_ref = jnp.transpose(x1, (0, 2, 1))
    v21_ref = v1_ref @ w1.T + b1
    v22_ref = v21_ref @ w2.T + b2
    assert jnp.allclose(v1, v1_ref, atol=1e-5)
    assert jnp.allclose(v22, v22_ref, atol=1e-5, rtol=1e-5)

    # Larger ragged case exercises the M tiling / padding / multi-step grid.
    x1_big = jax.random.normal(k_x, (4, 2, 37), dtype=jnp.float32)
    v1b, v22b = model_forward(x1_big, w1, b1, w2, b2, tm_max=64)
    jax.block_until_ready((v1b, v22b))
    v1b_ref = jnp.transpose(x1_big, (0, 2, 1))
    v22b_ref = (v1b_ref @ w1.T + b1) @ w2.T + b2
    assert jnp.allclose(v1b, v1b_ref, atol=1e-5)
    assert jnp.allclose(v22b, v22b_ref, atol=1e-5, rtol=1e-5)

    print("KERNEL_OK")
</pallas_src>

<mosaic_0001>
module attributes {stable_mosaic.version = 11 : i64} {
  func.func @_double_linear_kernel(%arg0: i32, %arg1: memref<8x128xf32, #tpu.memory_space<vmem>>, %arg2: memref<128x128xf32, #tpu.memory_space<vmem>>, %arg3: memref<1x128xf32, #tpu.memory_space<vmem>>, %arg4: memref<128x128xf32, #tpu.memory_space<vmem>>, %arg5: memref<1x128xf32, #tpu.memory_space<vmem>>, %arg6: memref<8x128xf32, #tpu.memory_space<vmem>>) attributes {dimension_semantics = [#tpu.dimension_semantics<parallel>], iteration_bounds = array<i64: 1>, scalar_prefetch = 0 : i64, scratch_operands = 0 : i64, tpu.core_type = #tpu.core_type<tc>, window_params = [{transform_indices = @transform_0, window_bounds = array<i64: 8, 128>}, {pipeline_mode = #tpu.pipeline_mode<synchronous>, transform_indices = @transform_1, window_bounds = array<i64: 128, 128>}, {pipeline_mode = #tpu.pipeline_mode<synchronous>, transform_indices = @transform_2, window_bounds = array<i64: 1, 128>}, {pipeline_mode = #tpu.pipeline_mode<synchronous>, transform_indices = @transform_3, window_bounds = array<i64: 128, 128>}, {pipeline_mode = #tpu.pipeline_mode<synchronous>, transform_indices = @transform_4, window_bounds = array<i64: 1, 128>}, {transform_indices = @transform_5, window_bounds = array<i64: 8, 128>}]} {
    %c0 = arith.constant 0 : index
    %c0_0 = arith.constant 0 : index
    %0 = vector.load %arg1[%c0, %c0_0] : memref<8x128xf32, #tpu.memory_space<vmem>>, vector<8x128xf32>
    %c0_1 = arith.constant 0 : index
    %c0_2 = arith.constant 0 : index
    %1 = vector.load %arg2[%c0_1, %c0_2] : memref<128x128xf32, #tpu.memory_space<vmem>>, vector<128x128xf32>
    %cst = arith.constant dense<0.000000e+00> : vector<8x128xf32>
    %2 = tpu.matmul %0, %1, %cst {dimension_numbers = #tpu.dot_dimension_numbers<[1], [0], [0], [1], [0, 0, 1, 1], [], []>} : vector<8x128xf32>, vector<128x128xf32>, vector<8x128xf32> -> vector<8x128xf32>
    %c0_3 = arith.constant 0 : index
    %c0_4 = arith.constant 0 : index
    %3 = vector.load %arg3[%c0_3, %c0_4] : memref<1x128xf32, #tpu.memory_space<vmem>>, vector<1x128xf32>
    %4 = vector.broadcast %3 : vector<1x128xf32> to vector<8x128xf32>
    %5 = arith.addf %2, %4 : vector<8x128xf32>
    %c0_5 = arith.constant 0 : index
    %c0_6 = arith.constant 0 : index
    %6 = vector.load %arg4[%c0_5, %c0_6] : memref<128x128xf32, #tpu.memory_space<vmem>>, vector<128x128xf32>
    %cst_7 = arith.constant dense<0.000000e+00> : vector<8x128xf32>
    %7 = tpu.matmul %5, %6, %cst_7 {dimension_numbers = #tpu.dot_dimension_numbers<[1], [0], [0], [1], [0, 0, 1, 1], [], []>} : vector<8x128xf32>, vector<128x128xf32>, vector<8x128xf32> -> vector<8x128xf32>
    %c0_8 = arith.constant 0 : index
    %c0_9 = arith.constant 0 : index
    %8 = vector.load %arg5[%c0_8, %c0_9] : memref<1x128xf32, #tpu.memory_space<vmem>>, vector<1x128xf32>
    %9 = vector.broadcast %8 : vector<1x128xf32> to vector<8x128xf32>
    %10 = arith.addf %7, %9 : vector<8x128xf32>
    %c0_10 = arith.constant 0 : index
    %c0_11 = arith.constant 0 : index
    %11 = vector.load %arg6[%c0_10, %c0_11] : memref<8x128xf32, #tpu.memory_space<vmem>>, vector<8x128xf32>
    tpu.vector_store %arg6[%c0_10, %c0_11], %10 {strides = array<i32>} : memref<8x128xf32, #tpu.memory_space<vmem>>, vector<8x128xf32>,
    return
  }
  func.func @transform_0(%arg0: i32) -> (i32, i32) {
    %c0_i32 = arith.constant 0 : i32
    %c0_i32_0 = arith.constant 0 : i32
    return %arg0, %c0_i32 : i32, i32
  }
  func.func @transform_1(%arg0: i32) -> (i32, i32) {
    %c0_i32 = arith.constant 0 : i32
    %c0_i32_0 = arith.constant 0 : i32
    %c0_i32_1 = arith.constant 0 : i32
    return %c0_i32, %c0_i32_0 : i32, i32
  }
  func.func @transform_2(%arg0: i32) -> (i32, i32) {
    %c0_i32 = arith.constant 0 : i32
    %c0_i32_0 = arith.constant 0 : i32
    %c0_i32_1 = arith.constant 0 : i32
    return %c0_i32, %c0_i32_0 : i32, i32
  }
  func.func @transform_3(%arg0: i32) -> (i32, i32) {
    %c0_i32 = arith.constant 0 : i32
    %c0_i32_0 = arith.constant 0 : i32
    %c0_i32_1 = arith.constant 0 : i32
    return %c0_i32, %c0_i32_0 : i32, i32
  }
  func.func @transform_4(%arg0: i32) -> (i32, i32) {
    %c0_i32 = arith.constant 0 : i32
    %c0_i32_0 = arith.constant 0 : i32
    %c0_i32_1 = arith.constant 0 : i32
    return %c0_i32, %c0_i32_0 : i32, i32
  }
  func.func @transform_5(%arg0: i32) -> (i32, i32) {
    %c0_i32 = arith.constant 0 : i32
    %c0_i32_0 = arith.constant 0 : i32
    return %arg0, %c0_i32 : i32, i32
  }
}

</mosaic_0001>

<llo_original>
// kernel: model_forward.1
$region0: #{model_forward.1}
  #allocation0 [shape = 'u32[]', space=smem, size = 0x4, offset = 0x4, fixed_abs, tag = 'smem constant byte address 0x4 - core index']
  #allocation1 [shape = 'u32[72,128]{1,0:T(1,128)}', space=vmem, size = 0x9000, scoped, tag = 'internal scratch']
  %s0 = inlined_call_operand.vmem [shape: f32[8,128], index: 0, kind: input, shape index: {}]
  %s1 = inlined_call_operand.vmem [shape: f32[128,128], index: 1, kind: input, shape index: {}]
  %s2 = inlined_call_operand.vmem [shape: f32[1,128], index: 2, kind: input, shape index: {}]
  %s3 = inlined_call_operand.vmem [shape: f32[128,128], index: 3, kind: input, shape index: {}]
  %s4 = inlined_call_operand.vmem [shape: f32[1,128], index: 4, kind: input, shape index: {}]
  %s5 = inlined_call_operand.vmem [shape: f32[8,128], index: 5, kind: output, shape index: {}]
  %s6 = sld [smem:[#allocation0]]
  $region30: #{model_forward.1} parent=0
    _
  %s8 = ssub.s32 1, %s6
  %s9 = scalar_select 0, %s8, %s6
  // Predicated region
  $region2: #{model_forward.1} parent=0 // pred_check
    _
  $region3: #{model_forward.1} parent=0 // pred_check_branch
    %11 = sbr.rel (0) target = $region5
  $region4: #{model_forward.1} parent=0 // pred_region
    _
  $region5: #{model_forward.1} parent=0 // pred_fallthru
    _
  // Predicated region
  $region6: #{model_forward.1} parent=0 // pred_check
    _
  $region7: #{model_forward.1} parent=0 // pred_check_branch
    %13 = sbr.rel (0) target = $region9
  $region8: #{model_forward.1} parent=0 // pred_region
    _
  $region9: #{model_forward.1} parent=0 // pred_fallthru
    _
  // Predicated region
  $region10: #{model_forward.1} parent=0 // pred_check
    _
  $region11: #{model_forward.1} parent=0 // pred_check_branch
    %15 = sbr.rel (0) target = $region13
  $region12: #{model_forward.1} parent=0 // pred_region
    _
  $region13: #{model_forward.1} parent=0 // pred_fallthru
    _
  // Predicated region
  $region14: #{model_forward.1} parent=0 // pred_check
    _
  $region15: #{model_forward.1} parent=0 // pred_check_branch
    %17 = sbr.rel (0) target = $region17
  $region16: #{model_forward.1} parent=0 // pred_region
    _
  $region17: #{model_forward.1} parent=0 // pred_fallthru
    _
  // Predicated region
  $region18: #{model_forward.1} parent=0 // pred_check
    _
  $region19: #{model_forward.1} parent=0 // pred_check_branch
    %19 = sbr.rel (0) target = $region21
  $region20: #{model_forward.1} parent=0 // pred_region
    _
  $region21: #{model_forward.1} parent=0 // pred_fallthru
    _
  %v20 = vld [vmem:[%s0] sm:$0xff]
  %v21 = vld [vmem:[%s1] sm:$0xff]
  %v22 = vld [vmem:[%s1 + $0x8] sm:$0xff]
  %v23 = vld [vmem:[%s1 + $0x10] sm:$0xff]
  %v24 = vld [vmem:[%s1 + $0x18] sm:$0xff]
  %v25 = vld [vmem:[%s1 + $0x20] sm:$0xff]
  %v26 = vld [vmem:[%s1 + $0x28] sm:$0xff]
  %v27 = vld [vmem:[%s1 + $0x30] sm:$0xff]
  %v28 = vld [vmem:[%s1 + $0x38] sm:$0xff]
  %v29 = vld [vmem:[%s1 + $0x40] sm:$0xff]
  %v30 = vld [vmem:[%s1 + $0x48] sm:$0xff]
  %v31 = vld [vmem:[%s1 + $0x50] sm:$0xff]
  %v32 = vld [vmem:[%s1 + $0x58] sm:$0xff]
  %v33 = vld [vmem:[%s1 + $0x60] sm:$0xff]
  %v34 = vld [vmem:[%s1 + $0x68] sm:$0xff]
  %v35 = vld [vmem:[%s1 + $0x70] sm:$0xff]
  %v36 = vld [vmem:[%s1 + $0x78] sm:$0xff]
  %v37 = vld [vmem:[%s2] sm:$0x1]
  %v39 = vperm.slane %v37, 0
  %41 = vmatpush.msra.mxu0 %v36
  %42 = vmatpush.msra.mxu0 %v35
  %43 = vmatpush.msra.mxu0 %v34
  %44 = vmatpush.msra.mxu0 %v33
  %45 = vmatpush.msra.mxu0 %v32
  %46 = vmatpush.msra.mxu0 %v31
  %47 = vmatpush.msra.mxu0 %v30
  %48 = vmatpush.msra.mxu0 %v29
  %49 = vmatpush.msra.mxu0 %v28
  %50 = vmatpush.msra.mxu0 %v27
  %51 = vmatpush.msra.mxu0 %v26
  %52 = vmatpush.msra.mxu0 %v25
  %53 = vmatpush.msra.mxu0 %v24
  %54 = vmatpush.msra.mxu0 %v23
  %55 = vmatpush.msra.mxu0 %v22
  %56 = vmatpush.msra.mxu0 %v21
  %57 = vmatmul.f32.gmra.mxu0 %v20
  %v58 = vpop.f32.mrf.mxu0
  %v59 = vadd.f32 %v39, %v58
  %60 = vdwg.mxu0
  %v61 = vld [vmem:[%s3] sm:$0xff]
  %v62 = vld [vmem:[%s3 + $0x8] sm:$0xff]
  %v63 = vld [vmem:[%s3 + $0x10] sm:$0xff]
  %v64 = vld [vmem:[%s3 + $0x18] sm:$0xff]
  %v65 = vld [vmem:[%s3 + $0x20] sm:$0xff]
  %v66 = vld [vmem:[%s3 + $0x28] sm:$0xff]
  %v67 = vld [vmem:[%s3 + $0x30] sm:$0xff]
  %v68 = vld [vmem:[%s3 + $0x38] sm:$0xff]
  %v69 = vld [vmem:[%s3 + $0x40] sm:$0xff]
  %v70 = vld [vmem:[%s3 + $0x48] sm:$0xff]
  %v71 = vld [vmem:[%s3 + $0x50] sm:$0xff]
  %v72 = vld [vmem:[%s3 + $0x58] sm:$0xff]
  %v73 = vld [vmem:[%s3 + $0x60] sm:$0xff]
  %v74 = vld [vmem:[%s3 + $0x68] sm:$0xff]
  %v75 = vld [vmem:[%s3 + $0x70] sm:$0xff]
  %v76 = vld [vmem:[%s3 + $0x78] sm:$0xff]
  %v77 = vld [vmem:[%s4] sm:$0x1]
  %v79 = vperm.slane %v77, 0
  %81 = vmatpush.msra.mxu0 %v76
  %82 = vmatpush.msra.mxu0 %v75
  %83 = vmatpush.msra.mxu0 %v74
  %84 = vmatpush.msra.mxu0 %v73
  %85 = vmatpush.msra.mxu0 %v72
  %86 = vmatpush.msra.mxu0 %v71
  %87 = vmatpush.msra.mxu0 %v70
  %88 = vmatpush.msra.mxu0 %v69
  %89 = vmatpush.msra.mxu0 %v68
  %90 = vmatpush.msra.mxu0 %v67
  %91 = vmatpush.msra.mxu0 %v66
  %92 = vmatpush.msra.mxu0 %v65
  %93 = vmatpush.msra.mxu0 %v64
  %94 = vmatpush.msra.mxu0 %v63
  %95 = vmatpush.msra.mxu0 %v62
  %96 = vmatpush.msra.mxu0 %v61
  %97 = vmatmul.f32.gmra.mxu0 %v59
  %v98 = vpop.f32.mrf.mxu0
  %v99 = vadd.f32 %v79, %v98
  %100 = vdwg.mxu0
  %101 = vst [vmem:[%s5] sm:$0xff] %v99
  // Predicated region
  $region22: #{model_forward.1} parent=0 // pred_check
    _
  $region23: #{model_forward.1} parent=0 // pred_check_branch
    %103 = sbr.rel (0) target = $region25
  $region24: #{model_forward.1} parent=0 // pred_region
    _
  $region25: #{model_forward.1} parent=0 // pred_fallthru
    _
  // Predicated region
  $region26: #{model_forward.1} parent=0 // pred_check
    _
  $region27: #{model_forward.1} parent=0 // pred_check_branch
    %105 = sbr.rel (0) target = $region29
  $region28: #{model_forward.1} parent=0 // pred_region
    _
  $region29: #{model_forward.1} parent=0 // pred_fallthru
    _

</llo_original>
